<compile_context>
chip_gen: v7x
topology: tpu7x:2x2x1
jax: 0.10.0
libtpu: 0.0.40
codegen_flags: <defaults>
</compile_context>

<pallas_src>
import math

import jax
import jax.numpy as jnp
from jax.experimental import pallas as pl
from jax.experimental.pallas import tpu as pltpu

LANES = 128
TARGET_TILE_BYTES = 2 * 1024 * 1024  # ~2 MiB per block (fits every generation)


def _tanh2_kernel(x_ref, o_ref):
    t = jnp.tanh(x_ref[...])
    o_ref[...] = t * t


def _min_sublane(dtype) -> int:
    # f32 -> 8, bf16/fp16 -> 16, int8/fp8 -> 32 (packed-vreg height).
    itemsize = jnp.dtype(dtype).itemsize
    return max(8, 32 // itemsize)


def _choose_width(n: int):
    """Widest lane-dense last dim (multiple of 128) that divides n exactly."""
    for w in (4096, 2048, 1024, 512, 256, 128):
        if n % w == 0:
            return w
    return None


def _choose_row_tile(rows: int, width: int, dtype) -> int:
    """Row-tile ~TARGET_TILE_BYTES, multiple of the dtype's sublane minimum."""
    itemsize = jnp.dtype(dtype).itemsize
    sub = _min_sublane(dtype)
    target_rows = max(1, TARGET_TILE_BYTES // (width * itemsize))
    rt = max(sub, (target_rows // sub) * sub)
    if rt >= rows:
        return rows  # single block spanning the full row dim (always legal)
    return rt        # multiple of `sub`; partial tail block handled by Pallas


def _tanh2_slab(slab: jax.Array) -> jax.Array:
    rows, width = slab.shape
    dtype = slab.dtype
    itemsize = jnp.dtype(dtype).itemsize
    row_tile = _choose_row_tile(rows, width, dtype)
    grid = (pl.cdiv(rows, row_tile),)
    n_elems = rows * width

    return pl.pallas_call(
        _tanh2_kernel,
        out_shape=jax.ShapeDtypeStruct((rows, width), dtype),
        grid_spec=pltpu.PrefetchScalarGridSpec(
            num_scalar_prefetch=0,
            grid=grid,
            in_specs=[pl.BlockSpec((row_tile, width), lambda i: (i, 0))],
            out_specs=pl.BlockSpec((row_tile, width), lambda i: (i, 0)),
        ),
        compiler_params=pltpu.CompilerParams(
            dimension_semantics=("parallel",),
        ),
        cost_estimate=pl.CostEstimate(
            flops=n_elems,
            transcendentals=n_elems,
            bytes_accessed=2 * n_elems * itemsize,
        ),
    )(slab)


def tanh2(x: jax.Array) -> jax.Array:
    """Elementwise tanh(x)^2 via a Pallas TPU kernel. Preserves shape & dtype."""
    orig_shape = x.shape
    n = math.prod(orig_shape) if orig_shape else 1
    if n == 0:
        return x

    flat = x.reshape(-1)
    width = _choose_width(n)
    if width is not None:
        # Fully aligned: pure reshape in, reshape out -- no pad, no slice.
        out = _tanh2_slab(flat.reshape(n // width, width))
        return out.reshape(orig_shape)

    # Ragged case: run the kernel over the 128-aligned bulk, tiny tail in JAX.
    bulk = (n // LANES) * LANES
    if bulk == 0:
        # TODO(synk): inputs with fewer than 128 elements fall back to plain JAX.
        return jnp.square(jnp.tanh(x))
    w = _choose_width(bulk)
    head = _tanh2_slab(flat[:bulk].reshape(bulk // w, w)).reshape(-1)
    tail = jnp.square(jnp.tanh(flat[bulk:]))
    return jnp.concatenate([head, tail]).reshape(orig_shape)


if __name__ == "__main__":
    key = jax.random.PRNGKey(0)
    # Small NCHW input consistent with typical conv-activation usage.
    x = jax.random.normal(key, (2, 4, 16, 16), dtype=jnp.float32)

    y = tanh2(x)
    y = jax.block_until_ready(y)

    # Correctness check against plain JAX reference.
    y_ref = jnp.square(jnp.tanh(x))
    assert y.shape == x.shape and y.dtype == x.dtype
    assert jnp.allclose(y, y_ref, atol=1e-6, rtol=1e-6)

    print("KERNEL_OK")
</pallas_src>

<mosaic_0001>
module attributes {stable_mosaic.version = 11 : i64} {
  func.func @_tanh2_kernel(%arg0: i32, %arg1: memref<1x2048xf32, #tpu.memory_space<vmem>>, %arg2: memref<1x2048xf32, #tpu.memory_space<vmem>>) attributes {dimension_semantics = [#tpu.dimension_semantics<parallel>], iteration_bounds = array<i64: 1>, scalar_prefetch = 0 : i64, scratch_operands = 0 : i64, tpu.core_type = #tpu.core_type<tc>, window_params = [{transform_indices = @transform_0, window_bounds = array<i64: 1, 2048>}, {transform_indices = @transform_1, window_bounds = array<i64: 1, 2048>}]} {
    %c0 = arith.constant 0 : index
    %c0_0 = arith.constant 0 : index
    %0 = vector.load %arg1[%c0, %c0_0] : memref<1x2048xf32, #tpu.memory_space<vmem>>, vector<1x2048xf32>
    %1 = math.tanh %0 : vector<1x2048xf32>
    %2 = arith.mulf %1, %1 : vector<1x2048xf32>
    %c0_1 = arith.constant 0 : index
    %c0_2 = arith.constant 0 : index
    %3 = vector.load %arg2[%c0_1, %c0_2] : memref<1x2048xf32, #tpu.memory_space<vmem>>, vector<1x2048xf32>
    tpu.vector_store %arg2[%c0_1, %c0_2], %2 {strides = array<i32>} : memref<1x2048xf32, #tpu.memory_space<vmem>>, vector<1x2048xf32>,
    return
  }
  func.func @transform_0(%arg0: i32) -> (i32, i32) {
    %c0_i32 = arith.constant 0 : i32
    %c0_i32_0 = arith.constant 0 : i32
    return %arg0, %c0_i32 : i32, i32
  }
  func.func @transform_1(%arg0: i32) -> (i32, i32) {
    %c0_i32 = arith.constant 0 : i32
    %c0_i32_0 = arith.constant 0 : i32
    return %arg0, %c0_i32 : i32, i32
  }
}

</mosaic_0001>

<llo_original>
// kernel: tpu_custom_call.1
$region0: #{tpu_custom_call.1}
  #allocation0 [shape = 'u32[]', space=smem, size = 0x4, offset = 0x4, fixed_abs, tag = 'smem constant byte address 0x4 - core index']
  #allocation1 [shape = 'u32[144,128]{1,0:T(1,128)}', space=vmem, size = 0x12000, scoped, tag = 'internal scratch']
  %s0 = inlined_call_operand.hbm [shape: f32[1,2048], index: 0, kind: input, shape index: {}]
  %s1 = inlined_call_operand.hbm [shape: f32[1,2048], index: 1, kind: output, shape index: {}]
  %s2 = sld [smem:[#allocation0]]
  $region18: #{tpu_custom_call.1} parent=0
    _
  %s4 = ssub.s32 1, %s2
  %s5 = scalar_select 0, %s4, %s2
  $region1: #{tpu_custom_call.1} parent=0
    #allocation2 [shape = 'u8[8192]{0}', space=vmem, size = 0x2000, scoped, tag = 'input window, operand 0, single buffered']
    #allocation3 [shape = 's32[1]{0}', space=sflag, size = 0x4, scoped, tag = 'scoped memory for tpu_custom_call.1']
    #allocation4 [shape = 's32[1]{0}', space=sflag, size = 0x4, scoped, tag = 'scoped memory for tpu_custom_call.1']
    #allocation5 [shape = 'u8[8192]{0}', space=vmem, size = 0x2000, scoped, tag = 'output window, operand 0, single buffered']
    %6 = vsyncpa [#allocation3], 0
    %7 = vsyncpa [#allocation4], 0
    // Predicated region
    $region2: #{tpu_custom_call.1} parent=1 // pred_check
      _
    $region3: #{tpu_custom_call.1} parent=1 // pred_check_branch
      %9 = sbr.rel (0) target = $region5
    $region4: #{tpu_custom_call.1} parent=1 // pred_region
      %s11 = ssub.s32 256, 256
      %12 = vsyncadd [#allocation3], %s11
      %s14 = sshll.u32 [#allocation2], 4
      %s15 = int_to_ptr.vmem [resolvable:$true] %s14
      %17 = dma.hbm_to_vmem [thread:$0]  %s0, 256, %s15, [#allocation3]
    $region5: #{tpu_custom_call.1} parent=1 // pred_fallthru
      _
    // Predicated region
    $region6: #{tpu_custom_call.1} parent=1 // pred_check
      _
    $region7: #{tpu_custom_call.1} parent=1 // pred_check_branch
      %19 = sbr.rel (0) target = $region9
    $region8: #{tpu_custom_call.1} parent=1 // pred_region
      %20 = dma.done [#allocation3], 256
    $region9: #{tpu_custom_call.1} parent=1 // pred_fallthru
      _
    %v21 = vld [vmem:[#allocation2] sm:$0xff]
    %v22 = vld [vmem:[#allocation2 + $0x8] sm:$0xff]
    %v23 = vtanh.pop %v21
    %v24 = vtanh.pop %v22
    %v25 = vmul.f32 %v23, %v23
    %v26 = vmul.f32 %v24, %v24
    %27 = vst [vmem:[#allocation5] sm:$0xff] %v25
    %28 = vst [vmem:[#allocation5 + $0x8] sm:$0xff] %v26
    // Predicated region
    $region10: #{tpu_custom_call.1} parent=1 // pred_check
      _
    $region11: #{tpu_custom_call.1} parent=1 // pred_check_branch
      %30 = sbr.rel (0) target = $region13
    $region12: #{tpu_custom_call.1} parent=1 // pred_region
      %s32 = ssub.s32 256, 256
      %33 = vsyncadd [#allocation4], %s32
      %s35 = sshll.u32 [#allocation5], 4
      %s36 = int_to_ptr.vmem [resolvable:$true] %s35
      %38 = dma.vmem_to_hbm [thread:$0]  %s36, 256, %s1, [#allocation4]
    $region13: #{tpu_custom_call.1} parent=1 // pred_fallthru
      _
    // Predicated region
    $region14: #{tpu_custom_call.1} parent=1 // pred_check
      _
    $region15: #{tpu_custom_call.1} parent=1 // pred_check_branch
      %40 = sbr.rel (0) target = $region17
    $region16: #{tpu_custom_call.1} parent=1 // pred_region
      %41 = dma.done [#allocation4], 256
    $region17: #{tpu_custom_call.1} parent=1 // pred_fallthru
      _
    %42 = vsyncpa [#allocation3], 1
    %43 = vsyncpa [#allocation4], 1

</llo_original>
